<compile_context>
chip_gen: v6e
topology: v6e:2x2x1
jax: 0.10.0
libtpu: 0.0.40
codegen_flags: <defaults>
</compile_context>

<pallas_src>
import functools

import jax
import jax.numpy as jnp
from jax.experimental import pallas as pl
from jax.experimental.pallas import tpu as pltpu


def _rmsnorm_kernel(x_ref, w_ref, o_ref, *, eps):
    # Phase 1 (reduction): only the (tm, 1) `inv` survives past this point, so
    # the fp32 full-tile temporaries created here are dead before phase 2
    # materializes its own — this halves the peak compiler-internal VMEM vs.
    # keeping one fp32 copy of the whole tile live across both phases.
    x32 = x_ref[...].astype(jnp.float32)
    var = jnp.mean(x32 * x32, axis=-1, keepdims=True)     # (tm, 1) fp32
    inv = jax.lax.rsqrt(var + eps)                         # EUP rsqrt
    # Phase 2 (scale): re-read the resident VMEM tile (vld is cheap) and match
    # the reference numerics exactly: normalize in fp32, downcast to the input
    # dtype, then multiply by the weight in the weight's dtype.
    y = (x_ref[...].astype(jnp.float32) * inv).astype(x_ref.dtype)
    o_ref[...] = (w_ref[...] * y).astype(o_ref.dtype)


def _row_packing(dtype) -> int:
    """Sublane packing factor: 8 for 32-bit, 16 for 16-bit, 32 for 8-bit dtypes."""
    bits = jnp.dtype(dtype).itemsize * 8
    return max(8, 256 // bits)


def _vmem_capacity_bytes() -> int:
    """Physical VMEM per TensorCore; conservative (v7x-sized) fallback if the
    query is unavailable on this backend/version."""
    try:
        return int(pltpu.get_tpu_info().vmem_capacity_bytes)
    except Exception:
        return 64 * 1024 * 1024


def _budgets() -> tuple[int, int]:
    """(pipeline VMEM budget for the tile picker, vmem_limit_bytes) per generation."""
    cap = _vmem_capacity_bytes()
    if cap <= 64 * 1024 * 1024:
        # v7x: 64 MiB physical — keep pipeline buffers modest, leave headroom
        # for fp32 temporaries, the weight block and internal scratch.
        return 24 * 1024 * 1024, 40 * 1024 * 1024
    # v5e/v6e: 128 MiB physical — let the tile grow (default scoped limit of
    # 16/32 MiB would otherwise cap it well below the ~512-row roofline zone).
    return 56 * 1024 * 1024, 80 * 1024 * 1024


def _pick_row_tile(rows: int, hidden: int, in_dtype, out_dtype, *,
                   target_rows: int = 512, vmem_budget_bytes: int = 24 * 1024 * 1024) -> int:
    """Row tile: big enough to amortize the ~0.35us/step pipeline overhead
    (512-row sweet spot), small enough that double-buffered in/out tiles PLUS
    the in-kernel fp32 temporaries fit the generation-aware VMEM budget, a
    multiple of the sublane packing, and rounded so the grid has an even step
    count (both v7x TensorCores get equal work, no tiny partial last block)."""
    pack = _row_packing(in_dtype)
    in_b = jnp.dtype(in_dtype).itemsize
    out_b = jnp.dtype(out_dtype).itemsize
    # Steady-state per-row footprint: double-buffered input + double-buffered
    # output tiles + ~2 full-tile fp32 temporaries inside the kernel body.
    bytes_per_row = 2 * hidden * in_b + 2 * hidden * out_b + 2 * hidden * 4
    tm = min(target_rows,
             max(pack, (vmem_budget_bytes // max(bytes_per_row, 1)) // pack * pack))
    tm = max(pack, min(tm, pl.cdiv(rows, pack) * pack))
    # Megacore balance (free on single-TC v5e/v6e): even step count and rows
    # redistributed evenly across the steps.
    steps = pl.cdiv(rows, tm)
    if steps > 1:
        steps = ((steps + 1) // 2) * 2
        tm = max(pack, pl.cdiv(pl.cdiv(rows, steps), pack) * pack)
    return tm


def llama_rms_norm(hidden_states: jax.Array, weight: jax.Array, eps: float = 1e-6,
                   *, row_tile: int | None = None) -> jax.Array:
    """Pallas TPU implementation of LlamaRMSNorm.forward."""
    orig_shape = hidden_states.shape
    hidden = orig_shape[-1]
    x2d = hidden_states.reshape(-1, hidden)                # (rows, H)
    rows = x2d.shape[0]
    w2d = weight.reshape(1, hidden)
    # Reference returns weight * x.to(input_dtype): result promotes to the
    # wider of (input dtype, weight dtype).
    out_dtype = jnp.result_type(hidden_states.dtype, weight.dtype)

    budget, vmem_limit = _budgets()
    tm = row_tile if row_tile is not None else _pick_row_tile(
        rows, hidden, hidden_states.dtype, out_dtype, vmem_budget_bytes=budget)
    grid = (pl.cdiv(rows, tm),)
    # No host-side jnp.pad / out[:rows] (each would cost a full extra HBM round
    # trip): Pallas masks the partial last block. Stale rows past the end of
    # x2d may produce inf/NaN in the rsqrt, but those rows are dropped.

    out = pl.pallas_call(
        functools.partial(_rmsnorm_kernel, eps=eps),
        out_shape=jax.ShapeDtypeStruct((rows, hidden), out_dtype),
        grid_spec=pltpu.PrefetchScalarGridSpec(
            num_scalar_prefetch=0,
            grid=grid,
            in_specs=[
                # TODO(synk): if an xprof trace on v7x shows exposed input DMA,
                # add pipeline_mode=pl.Buffered(3) here (extra VMEM, so only
                # after confirming headroom under the budget above).
                pl.BlockSpec((tm, hidden), lambda i: (i, 0)),
                pl.BlockSpec((1, hidden), lambda i: (0, 0)),
            ],
            out_specs=pl.BlockSpec((tm, hidden), lambda i: (i, 0)),
        ),
        compiler_params=pltpu.CompilerParams(
            dimension_semantics=("parallel",),   # rows independent -> megacore on v7x
            vmem_limit_bytes=vmem_limit,         # generation-aware scoped-VMEM override
        ),
    )(x2d, w2d)

    return out.reshape(orig_shape)


def _reference(hidden_states, weight, eps=1e-6):
    x = hidden_states.astype(jnp.float32)
    var = jnp.mean(x * x, axis=-1, keepdims=True)
    x = x * jax.lax.rsqrt(var + eps)
    return weight * x.astype(hidden_states.dtype)


if __name__ == "__main__":
    key = jax.random.PRNGKey(0)
    batch, seq, hidden = 2, 8, 32
    x = jax.random.normal(key, (batch, seq, hidden), dtype=jnp.float32)

    # Deterministic parameter init, matching nn.Parameter(torch.ones(hidden_size)).
    weight = jnp.ones((hidden,), dtype=jnp.float32)

    out = llama_rms_norm(x, weight, eps=1e-6)
    out = jax.block_until_ready(out)

    ref = _reference(x, weight, eps=1e-6)
    assert out.shape == x.shape and out.dtype == x.dtype
    assert jnp.allclose(out, ref, atol=1e-5, rtol=1e-5)
    print("KERNEL_OK")
</pallas_src>

<mosaic_0001>
module attributes {stable_mosaic.version = 11 : i64} {
  func.func @_rmsnorm_kernel(%arg0: i32, %arg1: memref<16x32xf32, #tpu.memory_space<vmem>>, %arg2: memref<1x32xf32, #tpu.memory_space<vmem>>, %arg3: memref<16x32xf32, #tpu.memory_space<vmem>>) attributes {dimension_semantics = [#tpu.dimension_semantics<parallel>], iteration_bounds = array<i64: 1>, scalar_prefetch = 0 : i64, scratch_operands = 0 : i64, tpu.core_type = #tpu.core_type<tc>, window_params = [{transform_indices = @transform_0, window_bounds = array<i64: 16, 32>}, {pipeline_mode = #tpu.pipeline_mode<synchronous>, transform_indices = @transform_1, window_bounds = array<i64: 1, 32>}, {transform_indices = @transform_2, window_bounds = array<i64: 16, 32>}]} {
    %c0 = arith.constant 0 : index
    %c0_0 = arith.constant 0 : index
    %0 = vector.load %arg1[%c0, %c0_0] : memref<16x32xf32, #tpu.memory_space<vmem>>, vector<16x32xf32>
    %1 = arith.mulf %0, %0 : vector<16x32xf32>
    %cst = arith.constant dense<0.000000e+00> : vector<16xf32>
    %2 = vector.multi_reduction <add>, %1, %cst [1] : vector<16x32xf32> to vector<16xf32>
    %3 = vector.shape_cast %2 : vector<16xf32> to vector<16x1xf32>
    %cst_1 = arith.constant 3.200000e+01 : f32
    %4 = vector.broadcast %cst_1 : f32 to vector<16x1xf32>
    %5 = arith.divf %3, %4 : vector<16x1xf32>
    %cst_2 = arith.constant 9.99999997E-7 : f32
    %6 = vector.broadcast %cst_2 : f32 to vector<16x1xf32>
    %7 = arith.addf %5, %6 : vector<16x1xf32>
    %8 = math.rsqrt %7 : vector<16x1xf32>
    %c0_3 = arith.constant 0 : index
    %c0_4 = arith.constant 0 : index
    %9 = vector.load %arg1[%c0_3, %c0_4] : memref<16x32xf32, #tpu.memory_space<vmem>>, vector<16x32xf32>
    %10 = vector.broadcast %8 : vector<16x1xf32> to vector<16x32xf32>
    %11 = arith.mulf %9, %10 : vector<16x32xf32>
    %c0_5 = arith.constant 0 : index
    %c0_6 = arith.constant 0 : index
    %12 = vector.load %arg2[%c0_5, %c0_6] : memref<1x32xf32, #tpu.memory_space<vmem>>, vector<1x32xf32>
    %13 = vector.broadcast %12 : vector<1x32xf32> to vector<16x32xf32>
    %14 = arith.mulf %13, %11 : vector<16x32xf32>
    %c0_7 = arith.constant 0 : index
    %c0_8 = arith.constant 0 : index
    %15 = vector.load %arg3[%c0_7, %c0_8] : memref<16x32xf32, #tpu.memory_space<vmem>>, vector<16x32xf32>
    tpu.vector_store %arg3[%c0_7, %c0_8], %14 {strides = array<i32>} : memref<16x32xf32, #tpu.memory_space<vmem>>, vector<16x32xf32>,
    return
  }
  func.func @transform_0(%arg0: i32) -> (i32, i32) {
    %c0_i32 = arith.constant 0 : i32
    %c0_i32_0 = arith.constant 0 : i32
    return %arg0, %c0_i32 : i32, i32
  }
  func.func @transform_1(%arg0: i32) -> (i32, i32) {
    %c0_i32 = arith.constant 0 : i32
    %c0_i32_0 = arith.constant 0 : i32
    %c0_i32_1 = arith.constant 0 : i32
    return %c0_i32, %c0_i32_0 : i32, i32
  }
  func.func @transform_2(%arg0: i32) -> (i32, i32) {
    %c0_i32 = arith.constant 0 : i32
    %c0_i32_0 = arith.constant 0 : i32
    return %arg0, %c0_i32 : i32, i32
  }
}

</mosaic_0001>

<llo_original>
// kernel: tpu_custom_call.1
$region0: #{tpu_custom_call.1}
  #allocation0 [shape = 'u32[]', space=smem, size = 0x4, offset = 0x4, fixed_abs, tag = 'smem constant byte address 0x4 - core index']
  #allocation1 [shape = 'u32[144,128]{1,0:T(1,128)}', space=vmem, size = 0x12000, scoped, tag = 'internal scratch']
  %s0 = inlined_call_operand.hbm [shape: f32[16,32], index: 0, kind: input, shape index: {}]
  %s1 = inlined_call_operand.vmem [shape: f32[1,32], index: 1, kind: input, shape index: {}]
  %s2 = inlined_call_operand.hbm [shape: f32[16,32], index: 2, kind: output, shape index: {}]
  %s3 = sld [smem:[#allocation0]]
  $region22: #{tpu_custom_call.1} parent=0
    _
  %s5 = ssub.s32 1, %s3
  %s6 = scalar_select 0, %s5, %s3
  $region1: #{tpu_custom_call.1} parent=0
    #allocation2 [shape = 'u8[8192]{0}', space=vmem, size = 0x2000, scoped, tag = 'input window, operand 0, single buffered']
    #allocation3 [shape = 's32[1]{0}', space=sflag, size = 0x4, scoped, tag = 'scoped memory for tpu_custom_call.1']
    #allocation4 [shape = 's32[1]{0}', space=sflag, size = 0x4, scoped, tag = 'scoped memory for tpu_custom_call.1']
    #allocation5 [shape = 'u8[8192]{0}', space=vmem, size = 0x2000, scoped, tag = 'output window, operand 0, single buffered']
    %7 = vsyncpa [#allocation3], 0
    %8 = vsyncpa [#allocation4], 0
    // Predicated region
    $region2: #{tpu_custom_call.1} parent=1 // pred_check
      _
    $region3: #{tpu_custom_call.1} parent=1 // pred_check_branch
      %10 = sbr.rel (0) target = $region5
    $region4: #{tpu_custom_call.1} parent=1 // pred_region
      %s12 = ssub.s32 256, 256
      %13 = vsyncadd [#allocation3], %s12
      %s14 = sshll.u32 [#allocation2], 4
      %s15 = int_to_ptr.vmem [resolvable:$true] %s14
      %20 = dma.hbm_to_vmem [thread:$0]  %s0, 256, %s15, [#allocation3], 128, 128, 8
    $region5: #{tpu_custom_call.1} parent=1 // pred_fallthru
      _
    // Predicated region
    $region6: #{tpu_custom_call.1} parent=1 // pred_check
      _
    $region7: #{tpu_custom_call.1} parent=1 // pred_check_branch
      %22 = sbr.rel (0) target = $region9
    $region8: #{tpu_custom_call.1} parent=1 // pred_region
      _
    $region9: #{tpu_custom_call.1} parent=1 // pred_fallthru
      _
    // Predicated region
    $region10: #{tpu_custom_call.1} parent=1 // pred_check
      _
    $region11: #{tpu_custom_call.1} parent=1 // pred_check_branch
      %24 = sbr.rel (0) target = $region13
    $region12: #{tpu_custom_call.1} parent=1 // pred_region
      %25 = dma.done [#allocation3], 256
    $region13: #{tpu_custom_call.1} parent=1 // pred_fallthru
      _
    %v26 = vld [vmem:[#allocation2] sm:$0xff]
    %v27 = vld [vmem:[#allocation2 + $0x8] sm:$0xff]
    %v28 = vmul.f32 %v26, %v26
    %v29 = vmul.f32 %v27, %v27
    %vm30 = vcmask 261120
    %v31 = vsel %vm30, %v28, 0.0
    %32 = vadd.xlane.f32.xlu0 %v31
    %v33 = vpop.xlane.xlu0 %32
    %v34 = vsel %vm30, %v29, 0.0
    %35 = vadd.xlane.f32.xlu0 %v34
    %v36 = vpop.xlane.xlu0 %35
    %v37 = vrcp.pop 32.0
    %v38 = vmul.f32 %v33, %v37
    %v39 = vmul.f32 %v36, %v37
    %v40 = vadd.f32 %v38, 1e-06
    %v41 = vadd.f32 %v39, 1e-06
    %v42 = vrsqrt.pop %v40
    %v43 = vrsqrt.pop %v41
    %v44 = vmul.f32 %v26, %v42
    %v45 = vmul.f32 %v27, %v43
    %v46 = vld [vmem:[%s1] sm:$0x1]
    %v48 = vlaneseq
    %v49 = vshrl.u32 %v48, 7
    %v50 = vsub.s32 0, %v49
    %v51 = vrot.slane %v46, %v50
    %v53 = vmul.f32 %v51, %v44
    %v54 = vmul.f32 %v51, %v45
    %55 = vst.msk [vmem:[#allocation5] sm:$0xff] %vm30, %v53
    %56 = vst.msk [vmem:[#allocation5 + $0x8] sm:$0xff] %vm30, %v54
    // Predicated region
    $region14: #{tpu_custom_call.1} parent=1 // pred_check
      _
    $region15: #{tpu_custom_call.1} parent=1 // pred_check_branch
      %58 = sbr.rel (0) target = $region17
    $region16: #{tpu_custom_call.1} parent=1 // pred_region
      %s60 = ssub.s32 256, 256
      %61 = vsyncadd [#allocation4], %s60
      %s62 = sshll.u32 [#allocation5], 4
      %s63 = int_to_ptr.vmem [resolvable:$true] %s62
      %68 = dma.vmem_to_hbm [thread:$0]  %s63, 256, %s2, [#allocation4], 128, 128, 8
    $region17: #{tpu_custom_call.1} parent=1 // pred_fallthru
      _
    // Predicated region
    $region18: #{tpu_custom_call.1} parent=1 // pred_check
      _
    $region19: #{tpu_custom_call.1} parent=1 // pred_check_branch
      %70 = sbr.rel (0) target = $region21
    $region20: #{tpu_custom_call.1} parent=1 // pred_region
      %71 = dma.done [#allocation4], 256
    $region21: #{tpu_custom_call.1} parent=1 // pred_fallthru
      _
    %72 = vsyncpa [#allocation3], 1
    %73 = vsyncpa [#allocation4], 1

</llo_original>
